<compile_context>
chip_gen: v7x
topology: tpu7x:2x2x1
jax: 0.10.0
libtpu: 0.0.40
codegen_flags: <defaults>
</compile_context>

<pallas_src>
import jax
import jax.numpy as jnp
from jax.experimental import pallas as pl
from jax.experimental.pallas import tpu as pltpu


def scse_kernel(x_ref, w1_ref, b1_ref, w2_ref, b2_ref, ws_ref, bs_ref, o_ref):
    # x_ref : (Nb, C, HW) f32 -- HW on lanes (lane-dense loads/stores)
    # w1    : (C, Cr)   b1 : (1, Cr)
    # w2    : (Cr, C)   b2 : (1, C)
    # ws    : (C, 1)    bs : (1, 1) scalar in SMEM
    x = x_ref[...]                                    # (Nb, C, HW)
    hw = x.shape[-1]

    # --- cSE branch: global avg pool -> FC -> relu -> FC -> sigmoid ---
    pooled = jnp.sum(x, axis=2) * (1.0 / hw)          # (Nb, C)   lane reduce (XLU)
    h = jnp.dot(pooled, w1_ref[...],
                preferred_element_type=jnp.float32) + b1_ref[...]
    h = jnp.maximum(h, 0.0)                           # (Nb, Cr)
    c_att = jax.nn.sigmoid(
        jnp.dot(h, w2_ref[...],
                preferred_element_type=jnp.float32) + b2_ref[...]
    )                                                 # (Nb, C)

    # --- sSE branch: per-pixel 1x1 conv C->1 -> sigmoid ---
    # VPU multiply + sublane reduce -> lane-dense (Nb, 1, HW).
    s_lin = jnp.sum(x * ws_ref[...], axis=1, keepdims=True) + bs_ref[0, 0]
    s_att = jax.nn.sigmoid(s_lin)                     # (Nb, 1, HW)

    # --- combine: x*cSE + x*sSE == x*(cSE + sSE) ---
    o_ref[...] = x * (c_att[:, :, None] + s_att)


def _pick_block_batch(N, C, HW, target_bytes=2 << 20):
    """Batches per grid step: ~2 MiB blocks, >= 2 grid steps when N > 1."""
    per_batch = C * HW * 4
    nb = max(1, min(N, target_bytes // per_batch))
    if N > 1:
        nb = min(nb, max(1, N // 2))      # keep both v7x TensorCores busy
    while N % nb:                         # avoid partial blocks
        nb -= 1
    return nb


def scse_attention(x, w1, b1, w2, b2, ws, bs):
    """x: (N, C, HW) float32 (NCHW with spatial flattened). Returns (N, C, HW)."""
    N, C, HW = x.shape
    Cr = w1.shape[1]

    nb = _pick_block_batch(N, C, HW)
    grid = (N // nb,)

    # Advisory cost estimate (~2 HBM passes, tiny compute).
    bytes_io = 2 * N * C * HW * 4 + (C * Cr + Cr + Cr * C + C + C + 1) * 4
    flops = N * (C * HW          # pooling adds
                 + 2 * C * HW    # sSE mul + reduce
                 + 4 * C * Cr    # two tiny FC layers
                 + 2 * C * HW)   # combine
    trans = N * (HW + C)         # sigmoids

    return pl.pallas_call(
        scse_kernel,
        out_shape=jax.ShapeDtypeStruct((N, C, HW), jnp.float32),
        grid_spec=pltpu.PrefetchScalarGridSpec(
            num_scalar_prefetch=0,
            grid=grid,
            in_specs=[
                pl.BlockSpec((nb, C, HW), lambda n: (n, 0, 0)),    # x
                pl.BlockSpec((C, Cr), lambda n: (0, 0)),           # w1
                pl.BlockSpec((1, Cr), lambda n: (0, 0)),           # b1
                pl.BlockSpec((Cr, C), lambda n: (0, 0)),           # w2
                pl.BlockSpec((1, C), lambda n: (0, 0)),            # b2
                pl.BlockSpec((C, 1), lambda n: (0, 0)),            # ws
                pl.BlockSpec(memory_space=pltpu.MemorySpace.SMEM), # bs (scalar)
            ],
            out_specs=pl.BlockSpec((nb, C, HW), lambda n: (n, 0, 0)),
        ),
        compiler_params=pltpu.CompilerParams(
            dimension_semantics=("parallel",),
        ),
        cost_estimate=pl.CostEstimate(
            flops=flops, transcendentals=trans, bytes_accessed=bytes_io),
    )(x, w1, b1, w2, b2, ws, bs)


def scse_reference(x_nchw, w1, b1, w2, b2, ws, bs):
    """Pure-JAX reference replicating the PyTorch SCSEModule forward (NCHW)."""
    pooled = jnp.mean(x_nchw, axis=(2, 3))                             # (N, C)
    h = jnp.maximum(pooled @ w1 + b1[0], 0.0)                          # (N, Cr)
    c_att = jax.nn.sigmoid(h @ w2 + b2[0])                             # (N, C)
    s_att = jax.nn.sigmoid(
        jnp.einsum('nchw,c->nhw', x_nchw, ws[:, 0]) + bs[0, 0])        # (N, H, W)
    return (x_nchw * c_att[:, :, None, None]
            + x_nchw * s_att[:, None, :, :])


if __name__ == "__main__":
    key = jax.random.PRNGKey(0)
    k_x, k_w1, k_b1, k_w2, k_b2, k_ws, k_bs = jax.random.split(key, 7)

    # Attention(name='scse', in_channels=32, reduction=16)
    N, C, H, W = 2, 32, 16, 16
    reduction = 16
    Cr = C // reduction

    x_nchw = jax.random.normal(k_x, (N, C, H, W), dtype=jnp.float32)

    # 1x1 conv weights, stored as (in, out) matrices (PyTorch conv weight is
    # (out, in, 1, 1); transpose of its squeeze).
    w1 = jax.random.normal(k_w1, (C, Cr), dtype=jnp.float32) * 0.1
    b1 = jax.random.normal(k_b1, (1, Cr), dtype=jnp.float32) * 0.1
    w2 = jax.random.normal(k_w2, (Cr, C), dtype=jnp.float32) * 0.1
    b2 = jax.random.normal(k_b2, (1, C), dtype=jnp.float32) * 0.1
    ws = jax.random.normal(k_ws, (C, 1), dtype=jnp.float32) * 0.1
    bs = jax.random.normal(k_bs, (1, 1), dtype=jnp.float32) * 0.1

    # Native NCHW layout: only flatten spatial dims (no transposes).
    x_flat = x_nchw.reshape(N, C, H * W)

    out_flat = scse_attention(x_flat, w1, b1, w2, b2, ws, bs)
    out_nchw = jax.block_until_ready(out_flat.reshape(N, C, H, W))

    ref = scse_reference(x_nchw, w1, b1, w2, b2, ws, bs)
    assert jnp.allclose(out_nchw, ref, atol=1e-5, rtol=1e-5), (
        "mismatch vs reference"
    )

    print("KERNEL_OK")
</pallas_src>

<mosaic_0001>
module attributes {stable_mosaic.version = 11 : i64} {
  func.func @scse_kernel(%arg0: i32, %arg1: memref<1x32x256xf32, #tpu.memory_space<vmem>>, %arg2: memref<32x2xf32, #tpu.memory_space<vmem>>, %arg3: memref<1x2xf32, #tpu.memory_space<vmem>>, %arg4: memref<2x32xf32, #tpu.memory_space<vmem>>, %arg5: memref<1x32xf32, #tpu.memory_space<vmem>>, %arg6: memref<32x1xf32, #tpu.memory_space<vmem>>, %arg7: memref<1x1xf32, #tpu.memory_space<smem>>, %arg8: memref<1x32x256xf32, #tpu.memory_space<vmem>>) attributes {dimension_semantics = [#tpu.dimension_semantics<parallel>], iteration_bounds = array<i64: 2>, scalar_prefetch = 0 : i64, scratch_operands = 0 : i64, tpu.core_type = #tpu.core_type<tc>, window_params = [{transform_indices = @transform_0, window_bounds = array<i64: 1, 32, 256>}, {pipeline_mode = #tpu.pipeline_mode<synchronous>, transform_indices = @transform_1, window_bounds = array<i64: 32, 2>}, {pipeline_mode = #tpu.pipeline_mode<synchronous>, transform_indices = @transform_2, window_bounds = array<i64: 1, 2>}, {pipeline_mode = #tpu.pipeline_mode<synchronous>, transform_indices = @transform_3, window_bounds = array<i64: 2, 32>}, {pipeline_mode = #tpu.pipeline_mode<synchronous>, transform_indices = @transform_4, window_bounds = array<i64: 1, 32>}, {pipeline_mode = #tpu.pipeline_mode<synchronous>, transform_indices = @transform_5, window_bounds = array<i64: 32, 1>}, {transform_indices = @transform_6, window_bounds = array<i64: 1, 1>}, {transform_indices = @transform_7, window_bounds = array<i64: 1, 32, 256>}]} {
    %c0 = arith.constant 0 : index
    %c0_0 = arith.constant 0 : index
    %c0_1 = arith.constant 0 : index
    %0 = vector.load %arg1[%c0, %c0_0, %c0_1] : memref<1x32x256xf32, #tpu.memory_space<vmem>>, vector<1x32x256xf32>
    %cst = arith.constant dense<0.000000e+00> : vector<1x32xf32>
    %1 = vector.multi_reduction <add>, %0, %cst [2] : vector<1x32x256xf32> to vector<1x32xf32>
    %cst_2 = arith.constant 3.906250e-03 : f32
    %2 = vector.broadcast %cst_2 : f32 to vector<1x32xf32>
    %3 = arith.mulf %1, %2 : vector<1x32xf32>
    %c0_3 = arith.constant 0 : index
    %c0_4 = arith.constant 0 : index
    %4 = vector.load %arg2[%c0_3, %c0_4] : memref<32x2xf32, #tpu.memory_space<vmem>>, vector<32x2xf32>
    %cst_5 = arith.constant dense<0.000000e+00> : vector<1x2xf32>
    %5 = tpu.matmul %3, %4, %cst_5 {dimension_numbers = #tpu.dot_dimension_numbers<[1], [0], [0], [1], [0, 0, 1, 1], [], []>} : vector<1x32xf32>, vector<32x2xf32>, vector<1x2xf32> -> vector<1x2xf32>
    %c0_6 = arith.constant 0 : index
    %c0_7 = arith.constant 0 : index
    %6 = vector.load %arg3[%c0_6, %c0_7] : memref<1x2xf32, #tpu.memory_space<vmem>>, vector<1x2xf32>
    %7 = arith.addf %5, %6 : vector<1x2xf32>
    %cst_8 = arith.constant 0.000000e+00 : f32
    %8 = vector.broadcast %cst_8 : f32 to vector<1x2xf32>
    %9 = arith.maximumf %7, %8 : vector<1x2xf32>
    %c0_9 = arith.constant 0 : index
    %c0_10 = arith.constant 0 : index
    %10 = vector.load %arg4[%c0_9, %c0_10] : memref<2x32xf32, #tpu.memory_space<vmem>>, vector<2x32xf32>
    %cst_11 = arith.constant dense<0.000000e+00> : vector<1x32xf32>
    %11 = tpu.matmul %9, %10, %cst_11 {dimension_numbers = #tpu.dot_dimension_numbers<[1], [0], [0], [1], [0, 0, 1, 1], [], []>} : vector<1x2xf32>, vector<2x32xf32>, vector<1x32xf32> -> vector<1x32xf32>
    %c0_12 = arith.constant 0 : index
    %c0_13 = arith.constant 0 : index
    %12 = vector.load %arg5[%c0_12, %c0_13] : memref<1x32xf32, #tpu.memory_space<vmem>>, vector<1x32xf32>
    %13 = arith.addf %11, %12 : vector<1x32xf32>
    %14 = arith.negf %13 : vector<1x32xf32>
    %15 = math.exp %14 : vector<1x32xf32>
    %cst_14 = arith.constant 1.000000e+00 : f32
    %16 = vector.broadcast %cst_14 : f32 to vector<1x32xf32>
    %17 = arith.addf %16, %15 : vector<1x32xf32>
    %18 = arith.divf %16, %17 : vector<1x32xf32>
    %c0_15 = arith.constant 0 : index
    %c0_16 = arith.constant 0 : index
    %19 = vector.load %arg6[%c0_15, %c0_16] : memref<32x1xf32, #tpu.memory_space<vmem>>, vector<32x1xf32>
    %20 = vector.shape_cast %19 : vector<32x1xf32> to vector<1x32x1xf32>
    %21 = vector.broadcast %20 : vector<1x32x1xf32> to vector<1x32x256xf32>
    %22 = arith.mulf %0, %21 : vector<1x32x256xf32>
    %cst_17 = arith.constant dense<0.000000e+00> : vector<1x256xf32>
    %23 = vector.multi_reduction <add>, %22, %cst_17 [1] : vector<1x32x256xf32> to vector<1x256xf32>
    %24 = vector.shape_cast %23 : vector<1x256xf32> to vector<1x1x256xf32>
    %c0_18 = arith.constant 0 : index
    %c0_19 = arith.constant 0 : index
    %25 = memref.load %arg7[%c0_18, %c0_19] : memref<1x1xf32, #tpu.memory_space<smem>>
    %26 = vector.broadcast %25 : f32 to vector<1x1x256xf32>
    %27 = arith.addf %24, %26 : vector<1x1x256xf32>
    %28 = arith.negf %27 : vector<1x1x256xf32>
    %29 = math.exp %28 : vector<1x1x256xf32>
    %cst_20 = arith.constant 1.000000e+00 : f32
    %30 = vector.broadcast %cst_20 : f32 to vector<1x1x256xf32>
    %31 = arith.addf %30, %29 : vector<1x1x256xf32>
    %32 = arith.divf %30, %31 : vector<1x1x256xf32>
    %33 = vector.shape_cast %18 : vector<1x32xf32> to vector<1x32x1xf32>
    %34 = vector.broadcast %33 : vector<1x32x1xf32> to vector<1x32x256xf32>
    %35 = vector.broadcast %32 : vector<1x1x256xf32> to vector<1x32x256xf32>
    %36 = arith.addf %34, %35 : vector<1x32x256xf32>
    %37 = arith.mulf %0, %36 : vector<1x32x256xf32>
    %c0_21 = arith.constant 0 : index
    %c0_22 = arith.constant 0 : index
    %c0_23 = arith.constant 0 : index
    %38 = vector.load %arg8[%c0_21, %c0_22, %c0_23] : memref<1x32x256xf32, #tpu.memory_space<vmem>>, vector<1x32x256xf32>
    tpu.vector_store %arg8[%c0_21, %c0_22, %c0_23], %37 {strides = array<i32>} : memref<1x32x256xf32, #tpu.memory_space<vmem>>, vector<1x32x256xf32>,
    return
  }
  func.func @transform_0(%arg0: i32) -> (i32, i32, i32) {
    %c0_i32 = arith.constant 0 : i32
    %c0_i32_0 = arith.constant 0 : i32
    %c0_i32_1 = arith.constant 0 : i32
    return %arg0, %c0_i32, %c0_i32_0 : i32, i32, i32
  }
  func.func @transform_1(%arg0: i32) -> (i32, i32) {
    %c0_i32 = arith.constant 0 : i32
    %c0_i32_0 = arith.constant 0 : i32
    %c0_i32_1 = arith.constant 0 : i32
    return %c0_i32, %c0_i32_0 : i32, i32
  }
  func.func @transform_2(%arg0: i32) -> (i32, i32) {
    %c0_i32 = arith.constant 0 : i32
    %c0_i32_0 = arith.constant 0 : i32
    %c0_i32_1 = arith.constant 0 : i32
    return %c0_i32, %c0_i32_0 : i32, i32
  }
  func.func @transform_3(%arg0: i32) -> (i32, i32) {
    %c0_i32 = arith.constant 0 : i32
    %c0_i32_0 = arith.constant 0 : i32
    %c0_i32_1 = arith.constant 0 : i32
    return %c0_i32, %c0_i32_0 : i32, i32
  }
  func.func @transform_4(%arg0: i32) -> (i32, i32) {
    %c0_i32 = arith.constant 0 : i32
    %c0_i32_0 = arith.constant 0 : i32
    %c0_i32_1 = arith.constant 0 : i32
    return %c0_i32, %c0_i32_0 : i32, i32
  }
  func.func @transform_5(%arg0: i32) -> (i32, i32) {
    %c0_i32 = arith.constant 0 : i32
    %c0_i32_0 = arith.constant 0 : i32
    %c0_i32_1 = arith.constant 0 : i32
    return %c0_i32, %c0_i32_0 : i32, i32
  }
  func.func @transform_6(%arg0: i32) -> (i32, i32) {
    %c0_i32 = arith.constant 0 : i32
    %c0_i32_0 = arith.constant 0 : i32
    %c0_i32_1 = arith.constant 0 : i32
    return %c0_i32, %c0_i32_0 : i32, i32
  }
  func.func @transform_7(%arg0: i32) -> (i32, i32, i32) {
    %c0_i32 = arith.constant 0 : i32
    %c0_i32_0 = arith.constant 0 : i32
    %c0_i32_1 = arith.constant 0 : i32
    return %arg0, %c0_i32, %c0_i32_0 : i32, i32, i32
  }
}

</mosaic_0001>

<llo_original>
// kernel: tpu_custom_call.1
$region0: #{tpu_custom_call.1}
  #allocation0 [shape = 'u32[]', space=smem, size = 0x4, offset = 0x4, fixed_abs, tag = 'smem constant byte address 0x4 - core index']
  #allocation1 [shape = 'u32[144,128]{1,0:T(1,128)}', space=vmem, size = 0x12000, scoped, tag = 'internal scratch']
  #allocation2 [shape = 'f32[1,1]{1,0:T(1,128)S(6)}', space=smem, size = 0x200, scoped, tag = 'scoped memory for tpu_custom_call.1']
  %s0 = inlined_call_operand.hbm [shape: f32[2,32,256], index: 0, kind: input, shape index: {}]
  %s1 = inlined_call_operand.vmem [shape: f32[32,2], index: 1, kind: input, shape index: {}]
  %s2 = inlined_call_operand.vmem [shape: f32[1,2], index: 2, kind: input, shape index: {}]
  %s3 = inlined_call_operand.vmem [shape: f32[2,32], index: 3, kind: input, shape index: {}]
  %s4 = inlined_call_operand.vmem [shape: f32[1,32], index: 4, kind: input, shape index: {}]
  %s5 = inlined_call_operand.vmem [shape: f32[32,1], index: 5, kind: input, shape index: {}]
  %s6 = inlined_call_operand.<no memory space> [shape: f32[1,1], index: 6, kind: input, shape index: {}]
  %s7 = inlined_call_operand.hbm [shape: f32[2,32,256], index: 7, kind: output, shape index: {}]
  %s8 = sld [smem:[#allocation0]]
  $region65: #{tpu_custom_call.1} parent=0
    _
  %s10 = ssub.s32 1, %s8
  %s11 = scalar_select 0, %s10, %s8
  %12 = sst [smem:[#allocation2]] %s6
  $region1: #{tpu_custom_call.1} parent=0
    #allocation3 [shape = 'u8[65536]{0}', space=vmem, size = 0x10000, scoped, tag = 'input window, operand 0']
    #allocation4 [shape = 's32[2]{0}', space=sflag, size = 0x8, scoped, tag = 'scoped memory for tpu_custom_call.1']
    #allocation5 [shape = 's32[2]{0}', space=sflag, size = 0x8, scoped, tag = 'scoped memory for tpu_custom_call.1']
    #allocation6 [shape = 'u8[65536]{0}', space=vmem, size = 0x10000, scoped, tag = 'output window, operand 0']
    %13 = vsyncpa [#allocation4], 0
    %s14 = scalar_lea.sflag [#allocation4], 1
    %15 = vsyncpa %s14, 0
    %16 = vsyncpa [#allocation5], 0
    %s17 = scalar_lea.sflag [#allocation5], 1
    %18 = vsyncpa %s17, 0
    loop: start=0, step=1, limit=4
    $region2: #{tpu_custom_call.1} parent=1 // loop_pre_header
      _
    $region3: #{tpu_custom_call.1} parent=1 // loop_header
      %s20 = sphi 0, %s24
      %p21 = scmp.ge.s32.totalorder %s20, 4
      %s30 = sphi 0, %s32
      %s33 = sphi 0, %s30
      %s34 = sphi 0, %s33
      %s50 = sphi 0, %s34
      %s54 = sphi 0, %s54
      %s56 = sphi 0, %s54
      %s57 = sphi 0, %s56
      %s71 = sphi 0, %s57
      %s75 = sphi 0, %s75
      %s77 = sphi 0, %s75
      %s78 = sphi 0, %s77
      %s92 = sphi 0, %s78
      %s96 = sphi 0, %s96
      %s98 = sphi 0, %s96
      %s99 = sphi 0, %s98
      %s113 = sphi 0, %s99
      %s117 = sphi 0, %s117
      %s119 = sphi 0, %s117
      %s120 = sphi 0, %s119
      %s134 = sphi 0, %s120
      %s138 = sphi 0, %s138
      %s140 = sphi 0, %s138
      %s141 = sphi 0, %s140
      %s155 = sphi 0, %s141
      %s159 = sphi 0, %s159
      %s161 = sphi 0, %s159
      %s162 = sphi 0, %s161
      %s176 = sphi 0, %s162
      %s182 = sphi 0, %s184
      %s185 = sphi 0, %s182
      %s186 = sphi 0, %s185
      %s202 = sphi 0, %s186
    $region4: #{tpu_custom_call.1} parent=1 // loop_header_branch
      %23 = sbr.rel (%p21) target = $region8
    $region5: #{tpu_custom_call.1} parent=1 // loop_body
      %s25 = ssub.s32 %s20, 1
      %s26 = ssub.s32 %s20, 2
      %s27 = sadd.s32 %s20, 1
      %s28 = ssub.s32 %s20, %s27
      %p29 = scmp.eq.s32.totalorder %s28, 0
      %s31 = sadd.s32 %s30, 1
      %s32 = scalar_select %p29, %s30, %s31
      %p35 = pneg %p29
      %p36 = scmp.eq.s32.totalorder %s20, 1
      %p37 = por %p35, %p36
      %p38 = scmp.ne.s32.totalorder %s30, %s33
      %p39 = scmp.eq.s32.totalorder %s20, 0
      %p40 = por %p38, %p39
      %p41 = scmp.ne.s32.totalorder %s30, %s33
      %p42 = scmp.eq.s32.totalorder %s25, 1
      %p43 = por %p41, %p42
      %p44 = scmp.ne.s32.totalorder %s33, %s34
      %p45 = scmp.eq.s32.totalorder %s25, 0
      %p46 = por %p44, %p45
      %p47 = scmp.ne.s32.totalorder %s33, %s34
      %p48 = scmp.eq.s32.totalorder %s26, 1
      %p49 = por %p47, %p48
      %p51 = scmp.ne.s32.totalorder %s34, %s50
      %p52 = scmp.eq.s32.totalorder %s26, 0
      %p53 = por %p51, %p52
      %s55 = sadd.s32 %s54, 1
      %p58 = scmp.eq.s32.totalorder %s20, 1
      %p59 = scmp.ne.s32.totalorder %s54, %s56
      %p60 = scmp.eq.s32.totalorder %s20, 0
      %p61 = por %p59, %p60
      %p62 = scmp.ne.s32.totalorder %s54, %s56
      %p63 = scmp.eq.s32.totalorder %s25, 1
      %p64 = por %p62, %p63
      %p65 = scmp.ne.s32.totalorder %s56, %s57
      %p66 = scmp.eq.s32.totalorder %s25, 0
      %p67 = por %p65, %p66
      %p68 = scmp.ne.s32.totalorder %s56, %s57
      %p69 = scmp.eq.s32.totalorder %s26, 1
      %p70 = por %p68, %p69
      %p72 = scmp.ne.s32.totalorder %s57, %s71
      %p73 = scmp.eq.s32.totalorder %s26, 0
      %p74 = por %p72, %p73
      %s76 = sadd.s32 %s75, 1
      %p79 = scmp.eq.s32.totalorder %s20, 1
      %p80 = scmp.ne.s32.totalorder %s75, %s77
      %p81 = scmp.eq.s32.totalorder %s20, 0
      %p82 = por %p80, %p81
      %p83 = scmp.ne.s32.totalorder %s75, %s77
      %p84 = scmp.eq.s32.totalorder %s25, 1
      %p85 = por %p83, %p84
      %p86 = scmp.ne.s32.totalorder %s77, %s78
      %p87 = scmp.eq.s32.totalorder %s25, 0
      %p88 = por %p86, %p87
      %p89 = scmp.ne.s32.totalorder %s77, %s78
      %p90 = scmp.eq.s32.totalorder %s26, 1
      %p91 = por %p89, %p90
      %p93 = scmp.ne.s32.totalorder %s78, %s92
      %p94 = scmp.eq.s32.totalorder %s26, 0
      %p95 = por %p93, %p94
      %s97 = sadd.s32 %s96, 1
      %p100 = scmp.eq.s32.totalorder %s20, 1
      %p101 = scmp.ne.s32.totalorder %s96, %s98
      %p102 = scmp.eq.s32.totalorder %s20, 0
      %p103 = por %p101, %p102
      %p104 = scmp.ne.s32.totalorder %s96, %s98
      %p105 = scmp.eq.s32.totalorder %s25, 1
      %p106 = por %p104, %p105
      %p107 = scmp.ne.s32.totalorder %s98, %s99
      %p108 = scmp.eq.s32.totalorder %s25, 0
      %p109 = por %p107, %p108
      %p110 = scmp.ne.s32.totalorder %s98, %s99
      %p111 = scmp.eq.s32.totalorder %s26, 1
      %p112 = por %p110, %p111
      %p114 = scmp.ne.s32.totalorder %s99, %s113
      %p115 = scmp.eq.s32.totalorder %s26, 0
      %p116 = por %p114, %p115
      %s118 = sadd.s32 %s117, 1
      %p121 = scmp.eq.s32.totalorder %s20, 1
      %p122 = scmp.ne.s32.totalorder %s117, %s119
      %p123 = scmp.eq.s32.totalorder %s20, 0
      %p124 = por %p122, %p123
      %p125 = scmp.ne.s32.totalorder %s117, %s119
      %p126 = scmp.eq.s32.totalorder %s25, 1
      %p127 = por %p125, %p126
      %p128 = scmp.ne.s32.totalorder %s119, %s120
      %p129 = scmp.eq.s32.totalorder %s25, 0
      %p130 = por %p128, %p129
      %p131 = scmp.ne.s32.totalorder %s119, %s120
      %p132 = scmp.eq.s32.totalorder %s26, 1
      %p133 = por %p131, %p132
      %p135 = scmp.ne.s32.totalorder %s120, %s134
      %p136 = scmp.eq.s32.totalorder %s26, 0
      %p137 = por %p135, %p136
      %s139 = sadd.s32 %s138, 1
      %p142 = scmp.eq.s32.totalorder %s20, 1
      %p143 = scmp.ne.s32.totalorder %s138, %s140
      %p144 = scmp.eq.s32.totalorder %s20, 0
      %p145 = por %p143, %p144
      %p146 = scmp.ne.s32.totalorder %s138, %s140
      %p147 = scmp.eq.s32.totalorder %s25, 1
      %p148 = por %p146, %p147
      %p149 = scmp.ne.s32.totalorder %s140, %s141
      %p150 = scmp.eq.s32.totalorder %s25, 0
      %p151 = por %p149, %p150
      %p152 = scmp.ne.s32.totalorder %s140, %s141
      %p153 = scmp.eq.s32.totalorder %s26, 1
      %p154 = por %p152, %p153
      %p156 = scmp.ne.s32.totalorder %s141, %s155
      %p157 = scmp.eq.s32.totalorder %s26, 0
      %p158 = por %p156, %p157
      %s160 = sadd.s32 %s159, 1
      %p163 = scmp.eq.s32.totalorder %s20, 1
      %p164 = scmp.ne.s32.totalorder %s159, %s161
      %p165 = scmp.eq.s32.totalorder %s20, 0
      %p166 = por %p164, %p165
      %p167 = scmp.ne.s32.totalorder %s159, %s161
      %p168 = scmp.eq.s32.totalorder %s25, 1
      %p169 = por %p167, %p168
      %p170 = scmp.ne.s32.totalorder %s161, %s162
      %p171 = scmp.eq.s32.totalorder %s25, 0
      %p172 = por %p170, %p171
      %p173 = scmp.ne.s32.totalorder %s161, %s162
      %p174 = scmp.eq.s32.totalorder %s26, 1
      %p175 = por %p173, %p174
      %p177 = scmp.ne.s32.totalorder %s162, %s176
      %p178 = scmp.eq.s32.totalorder %s26, 0
      %p179 = por %p177, %p178
      %s180 = ssub.s32 %s20, %s27
      %p181 = scmp.eq.s32.totalorder %s180, 0
      %s183 = sadd.s32 %s182, 1
      %s184 = scalar_select %p181, %s182, %s183
      %p187 = pneg %p181
      %p188 = scmp.eq.s32.totalorder %s20, 1
      %p189 = por %p187, %p188
      %p190 = scmp.ne.s32.totalorder %s182, %s185
      %p191 = scmp.eq.s32.totalorder %s20, 0
      %p192 = por %p190, %p191
      %p193 = scmp.ne.s32.totalorder %s182, %s185
      %p194 = scmp.eq.s32.totalorder %s25, 1
      %p195 = por %p193, %p194
      %p196 = scmp.ne.s32.totalorder %s185, %s186
      %p197 = scmp.eq.s32.totalorder %s25, 0
      %p198 = por %p196, %p197
      %p199 = scmp.ne.s32.totalorder %s185, %s186
      %p200 = scmp.eq.s32.totalorder %s26, 1
      %p201 = por %p199, %p200
      %p203 = scmp.ne.s32.totalorder %s186, %s202
      %p204 = scmp.eq.s32.totalorder %s26, 0
      %p205 = por %p203, %p204
      %p206 = scmp.le.s32.totalorder 1, %s20
      %p207 = scmp.lt.s32.totalorder %s20, 3
      %p208 = pnand %p206, %p207
      %p209 = pneg %p208
      // Predicated region
      $region9: #{tpu_custom_call.1} parent=5 // pred_check
        _
      $region10: #{tpu_custom_call.1} parent=5 // pred_check_branch
        %211 = sbr.rel (%p208) target = $region12
      $region11: #{tpu_custom_call.1} parent=5 // pred_region
        %s212 = ssub.s32 %s20, 1
        // Predicated region
        $region13: #{tpu_custom_call.1} parent=11 // pred_check
          %p213 = pneg %p67
        $region14: #{tpu_custom_call.1} parent=11 // pred_check_branch
          %215 = sbr.rel (%p213) target = $region16
        $region15: #{tpu_custom_call.1} parent=11 // pred_region
          _
        $region16: #{tpu_custom_call.1} parent=11 // pred_fallthru
          _
        // Predicated region
        $region17: #{tpu_custom_call.1} parent=11 // pred_check
          %p216 = pneg %p88
        $region18: #{tpu_custom_call.1} parent=11 // pred_check_branch
          %218 = sbr.rel (%p216) target = $region20
        $region19: #{tpu_custom_call.1} parent=11 // pred_region
          _
        $region20: #{tpu_custom_call.1} parent=11 // pred_fallthru
          _
        // Predicated region
        $region21: #{tpu_custom_call.1} parent=11 // pred_check
          %p219 = pneg %p109
        $region22: #{tpu_custom_call.1} parent=11 // pred_check_branch
          %221 = sbr.rel (%p219) target = $region24
        $region23: #{tpu_custom_call.1} parent=11 // pred_region
          _
        $region24: #{tpu_custom_call.1} parent=11 // pred_fallthru
          _
        // Predicated region
        $region25: #{tpu_custom_call.1} parent=11 // pred_check
          %p222 = pneg %p130
        $region26: #{tpu_custom_call.1} parent=11 // pred_check_branch
          %224 = sbr.rel (%p222) target = $region28
        $region27: #{tpu_custom_call.1} parent=11 // pred_region
          _
        $region28: #{tpu_custom_call.1} parent=11 // pred_fallthru
          _
        // Predicated region
        $region29: #{tpu_custom_call.1} parent=11 // pred_check
          %p225 = pneg %p151
        $region30: #{tpu_custom_call.1} parent=11 // pred_check_branch
          %227 = sbr.rel (%p225) target = $region32
        $region31: #{tpu_custom_call.1} parent=11 // pred_region
          _
        $region32: #{tpu_custom_call.1} parent=11 // pred_fallthru
          _
        // Predicated region
        $region33: #{tpu_custom_call.1} parent=11 // pred_check
          %p228 = pneg %p172
        $region34: #{tpu_custom_call.1} parent=11 // pred_check_branch
          %230 = sbr.rel (%p228) target = $region36
        $region35: #{tpu_custom_call.1} parent=11 // pred_region
          _
        $region36: #{tpu_custom_call.1} parent=11 // pred_fallthru
          _
      $region12: #{tpu_custom_call.1} parent=5 // pred_fallthru
        _
      %p231 = scmp.lt.s32.totalorder %s20, 2
      // Predicated region
      $region37: #{tpu_custom_call.1} parent=5 // pred_check
        %p232 = pneg %p231
      $region38: #{tpu_custom_call.1} parent=5 // pred_check_branch
        %234 = sbr.rel (%p232) target = $region40
      $region39: #{tpu_custom_call.1} parent=5 // pred_region
        // Predicated region
        $region41: #{tpu_custom_call.1} parent=39 // pred_check
          %p235 = pneg %p40
        $region42: #{tpu_custom_call.1} parent=39 // pred_check_branch
          %237 = sbr.rel (%p235) target = $region44
        $region43: #{tpu_custom_call.1} parent=39 // pred_region
          %s238 = sand.u32 %s30, 1
          %s239 = scalar_lea.sflag [#allocation4], %s238
          %s240 = sand.u32 %s30, 1
          %s241 = smul.addr %s240, 64
          %s242 = scalar_lea.vmem [#allocation3], %s241
          %s244 = ssub.s32 1024, 1024
          %245 = vsyncadd %s239, %s244
          %s246 = smul.addr %s20, 8
          %s247 = smul.addr %s246, 128
          %s248 = scalar_lea.hbm %s0, %s247
          %s249 = sshll.u32 %s242, 4
          %s250 = int_to_ptr.vmem [resolvable:$true] %s249
          %255 = dma.hbm_to_vmem [thread:$0]  %s248, 1024, %s250, %s239, 256, 256, 16
        $region44: #{tpu_custom_call.1} parent=39 // pred_fallthru
          _
      $region40: #{tpu_custom_call.1} parent=5 // pred_fallthru
        _
      %p256 = scmp.le.s32.totalorder 1, %s20
      %p257 = scmp.lt.s32.totalorder %s20, 3
      %p258 = pnand %p256, %p257
      %p259 = pneg %p258
      // Predicated region
      $region45: #{tpu_custom_call.1} parent=5 // pred_check
        _
      $region46: #{tpu_custom_call.1} parent=5 // pred_check_branch
        %261 = sbr.rel (%p258) target = $region48
      $region47: #{tpu_custom_call.1} parent=5 // pred_region
        %s262 = ssub.s32 %s20, 1
        %s263 = sand.u32 %s33, 1
        %s264 = scalar_lea.sflag [#allocation4], %s263
        %s265 = sand.u32 %s33, 1
        %s266 = smul.addr %s265, 64
        %s267 = scalar_lea.vmem [#allocation3], %s266
        // Predicated region
        $region49: #{tpu_custom_call.1} parent=47 // pred_check
          %p268 = pneg %p46
        $region50: #{tpu_custom_call.1} parent=47 // pred_check_branch
          %270 = sbr.rel (%p268) target = $region52
        $region51: #{tpu_custom_call.1} parent=47 // pred_region
          %271 = dma.done %s264, 1024
        $region52: #{tpu_custom_call.1} parent=47 // pred_fallthru
          _
        %s272 = sand.u32 %s33, 1
        %s273 = scalar_lea.sflag [#allocation4], %s272
        %s274 = sand.u32 %s33, 1
        %s275 = smul.addr %s274, 64
        %s276 = scalar_lea.vmem [#allocation3], %s275
        %p277 = pneg %p46
        %p278 = pneg %p43
        %p279 = pneg %p67
        %p280 = pneg %p64
        %p281 = pneg %p88
        %p282 = pneg %p85
        %p283 = pneg %p109
        %p284 = pneg %p106
        %p285 = pneg %p130
        %p286 = pneg %p127
        %p287 = pneg %p151
        %p288 = pneg %p148
        %p289 = pneg %p172
        %p290 = pneg %p169
        %p291 = pneg %p198
        %p292 = pneg %p195
        %s293 = sand.u32 %s185, 1
        %s294 = scalar_lea.sflag [#allocation5], %s293
        %s295 = sand.u32 %s185, 1
        %s296 = smul.addr %s295, 64
        %s297 = scalar_lea.vmem [#allocation6], %s296
        %v298 = vld [vmem:[%s267] sm:$0xff]
        %v299 = vld [vmem:[%s267 + $0x8] sm:$0xff]
        %v300 = vld [vmem:[%s267 + $0x10] sm:$0xff]
        %v301 = vld [vmem:[%s267 + $0x18] sm:$0xff]
        %v302 = vld [vmem:[%s267 + $0x20] sm:$0xff]
        %v303 = vld [vmem:[%s267 + $0x28] sm:$0xff]
        %v304 = vld [vmem:[%s267 + $0x30] sm:$0xff]
        %v305 = vld [vmem:[%s267 + $0x38] sm:$0xff]
        %v306 = vadd.f32 %v298, %v299
        %307 = vadd.xlane.f32.xlu0 %v306
        %v308 = vpop.xlane.xlu0 %307
        %v309 = vadd.f32 %v300, %v301
        %310 = vadd.xlane.f32.xlu0 %v309
        %v311 = vpop.xlane.xlu0 %310
        %v312 = vadd.f32 %v302, %v303
        %313 = vadd.xlane.f32.xlu0 %v312
        %v314 = vpop.xlane.xlu0 %313
        %v315 = vadd.f32 %v304, %v305
        %316 = vadd.xlane.f32.xlu0 %v315
        %v317 = vpop.xlane.xlu0 %316
        %v318 = vmul.f32 %v308, 0.00390625
        %v319 = vmul.f32 %v311, 0.00390625
        %v320 = vmul.f32 %v314, 0.00390625
        %v321 = vmul.f32 %v317, 0.00390625
        %v322 = vld [vmem:[%s1] sm:$0xff]
        %v323 = vld [vmem:[%s1 + $0x8] sm:$0xff]
        %v324 = vld [vmem:[%s1 + $0x10] sm:$0xff]
        %v325 = vld [vmem:[%s1 + $0x18] sm:$0xff]
        %v326 = vld [vmem:[%s2] sm:$0x1]
        %v331 = vlaneseq
        %v332 = vand.u32 %v331, 127
        %v333 = vlaneseq
        %v334 = vshrl.u32 %v333, 7
        %v335 = vsub.s32 %v332, %v334
        %v336 = vrot.slane %v318, %v335
        %v337 = vadd.s32 %v332, 4294967288
        %v338 = vlaneseq
        %v339 = vshrl.u32 %v338, 7
        %v340 = vsub.s32 %v337, %v339
        %v341 = vrot.slane %v319, %v340
        %vm342 = vcmask 130112
        %v343 = vsel %vm342, %v341, %v336
        %v344 = vadd.s32 %v332, 4294967280
        %v345 = vlaneseq
        %v346 = vshrl.u32 %v345, 7
        %v347 = vsub.s32 %v344, %v346
        %v348 = vrot.slane %v320, %v347
        %vm349 = vcmask 195712
        %v350 = vsel %vm349, %v348, %v343
        %v351 = vadd.s32 %v332, 4294967272
        %v352 = vlaneseq
        %v353 = vshrl.u32 %v352, 7
        %v354 = vsub.s32 %v351, %v353
        %v355 = vrot.slane %v321, %v354
        %vm356 = vcmask 261312
        %v357 = vsel %vm356, %v355, %v350
        %vm358 = vcmask 261120
        %v359 = vsel %vm358, %v357, 0
        %361 = vmatprep.subr.mxu0 0.0
        %362 = vmatpush1.msra.mxu0 %v322
        %363 = vmatprep.subr.mxu0 0.0
        %364 = vmatpush1.msra.mxu0 %v323
        %365 = vmatprep.subr.mxu0 0.0
        %366 = vmatpush1.msra.mxu0 %v324
        %367 = vmatprep.subr.mxu0 0.0
        %368 = vmatpush1.msra.mxu0 %v325
        %369 = vmatprep.subr.mxu0 0.0
        %370 = vmatpush1.msra.mxu0 0.0
        %371 = vmatprep.subr.mxu0 0.0
        %372 = vmatpush1.msra.mxu0 0.0
        %373 = vmatprep.subr.mxu0 0.0
        %374 = vmatpush1.msra.mxu0 0.0
        %375 = vmatprep.subr.mxu0 0.0
        %376 = vmatpush1.msra.mxu0 0.0
        %377 = vmatprep.subr.mxu0 0.0
        %378 = vmatpush1.msra.mxu0 0.0
        %379 = vmatprep.subr.mxu0 0.0
        %380 = vmatpush1.msra.mxu0 0.0
        %381 = vmatprep.subr.mxu0 0.0
        %382 = vmatpush1.msra.mxu0 0.0
        %383 = vmatprep.subr.mxu0 0.0
        %384 = vmatpush1.msra.mxu0 0.0
        %385 = vmatprep.subr.mxu0 0.0
        %386 = vmatpush1.msra.mxu0 0.0
        %387 = vmatprep.subr.mxu0 0.0
        %388 = vmatpush1.msra.mxu0 0.0
        %389 = vmatprep.subr.mxu0 0.0
        %390 = vmatpush1.msra.mxu0 0.0
        %391 = vmatprep.subr.mxu0 0.0
        %392 = vmatpush1.msra.mxu0 0.0
        %393 = vmatprep.subr.mxu0 0.0
        %394 = vmatpush1.msra.mxu0 0.0
        %395 = vmatprep.subr.mxu0 0.0
        %396 = vmatpush1.msra.mxu0 0.0
        %397 = vmatprep.subr.mxu0 0.0
        %398 = vmatpush1.msra.mxu0 0.0
        %399 = vmatprep.subr.mxu0 0.0
        %400 = vmatpush1.msra.mxu0 0.0
        %401 = vmatprep.subr.mxu0 0.0
        %402 = vmatpush1.msra.mxu0 0.0
        %403 = vmatprep.subr.mxu0 0.0
        %404 = vmatpush1.msra.mxu0 0.0
        %405 = vmatprep.subr.mxu0 0.0
        %406 = vmatpush1.msra.mxu0 0.0
        %407 = vmatprep.subr.mxu0 0.0
        %408 = vmatpush1.msra.mxu0 0.0
        %409 = vmatprep.subr.mxu0 0.0
        %410 = vmatpush1.msra.mxu0 0.0
        %411 = vmatprep.subr.mxu0 0.0
        %412 = vmatpush1.msra.mxu0 0.0
        %413 = vmatprep.subr.mxu0 0.0
        %414 = vmatpush1.msra.mxu0 0.0
        %415 = vmatprep.subr.mxu0 0.0
        %416 = vmatpush1.msra.mxu0 0.0
        %417 = vmatprep.subr.mxu0 0.0
        %418 = vmatpush1.msra.mxu0 0.0
        %419 = vmatprep.subr.mxu0 0.0
        %420 = vmatpush1.msra.mxu0 0.0
        %421 = vmatprep.subr.mxu0 0.0
        %422 = vmatpush1.msra.mxu0 0.0
        %423 = vmatprep.subr.mxu0 0.0
        %424 = vmatpush1.msra.mxu0 0.0
        %425 = vmatprep.mubr.f32.mxu0 0.0
        %426 = vmatmul.mubr.f32.gmra.mrb[0].mxu0 %v359
        %v427 = vpop.f32.mrb[0].mxu0
        %v428 = vadd.f32 %v326, %v427
        %v429 = vpop.f32.mrb[0].mxu0
        %430 = vdwg.mxu0
        %v431 = vmax.f32 %v428, 0.0
        %v432 = vld [vmem:[%s3] sm:$0x3]
        %v433 = vld [vmem:[%s4] sm:$0x1]
        %vm434 = vcmask 15360
        %v436 = vsel %vm434, %v431, 0
        %vm438 = vcmask 1041408
        %v440 = vsel %vm438, %v432, 0
        %442 = vmatprep.subr.mxu0 0.0
        %443 = vmatpush1.msra.mxu0 %v440
        %444 = vmatprep.subr.mxu0 0.0
        %445 = vmatpush1.msra.mxu0 0.0
        %446 = vmatprep.subr.mxu0 0.0
        %447 = vmatpush1.msra.mxu0 0.0
        %448 = vmatprep.subr.mxu0 0.0
        %449 = vmatpush1.msra.mxu0 0.0
        %450 = vmatprep.subr.mxu0 0.0
        %451 = vmatpush1.msra.mxu0 0.0
        %452 = vmatprep.subr.mxu0 0.0
        %453 = vmatpush1.msra.mxu0 0.0
        %454 = vmatprep.subr.mxu0 0.0
        %455 = vmatpush1.msra.mxu0 0.0
        %456 = vmatprep.subr.mxu0 0.0
        %457 = vmatpush1.msra.mxu0 0.0
        %458 = vmatprep.subr.mxu0 0.0
        %459 = vmatpush1.msra.mxu0 0.0
        %460 = vmatprep.subr.mxu0 0.0
        %461 = vmatpush1.msra.mxu0 0.0
        %462 = vmatprep.subr.mxu0 0.0
        %463 = vmatpush1.msra.mxu0 0.0
        %464 = vmatprep.subr.mxu0 0.0
        %465 = vmatpush1.msra.mxu0 0.0
        %466 = vmatprep.subr.mxu0 0.0
        %467 = vmatpush1.msra.mxu0 0.0
        %468 = vmatprep.subr.mxu0 0.0
        %469 = vmatpush1.msra.mxu0 0.0
        %470 = vmatprep.subr.mxu0 0.0
        %471 = vmatpush1.msra.mxu0 0.0
        %472 = vmatprep.subr.mxu0 0.0
        %473 = vmatpush1.msra.mxu0 0.0
        %474 = vmatprep.subr.mxu0 0.0
        %475 = vmatpush1.msra.mxu0 0.0
        %476 = vmatprep.subr.mxu0 0.0
        %477 = vmatpush1.msra.mxu0 0.0
        %478 = vmatprep.subr.mxu0 0.0
        %479 = vmatpush1.msra.mxu0 0.0
        %480 = vmatprep.subr.mxu0 0.0
        %481 = vmatpush1.msra.mxu0 0.0
        %482 = vmatprep.subr.mxu0 0.0
        %483 = vmatpush1.msra.mxu0 0.0
        %484 = vmatprep.subr.mxu0 0.0
        %485 = vmatpush1.msra.mxu0 0.0
        %486 = vmatprep.subr.mxu0 0.0
        %487 = vmatpush1.msra.mxu0 0.0
        %488 = vmatprep.subr.mxu0 0.0
        %489 = vmatpush1.msra.mxu0 0.0
        %490 = vmatprep.subr.mxu0 0.0
        %491 = vmatpush1.msra.mxu0 0.0
        %492 = vmatprep.subr.mxu0 0.0
        %493 = vmatpush1.msra.mxu0 0.0
        %494 = vmatprep.subr.mxu0 0.0
        %495 = vmatpush1.msra.mxu0 0.0
        %496 = vmatprep.subr.mxu0 0.0
        %497 = vmatpush1.msra.mxu0 0.0
        %498 = vmatprep.subr.mxu0 0.0
        %499 = vmatpush1.msra.mxu0 0.0
        %500 = vmatprep.subr.mxu0 0.0
        %501 = vmatpush1.msra.mxu0 0.0
        %502 = vmatprep.subr.mxu0 0.0
        %503 = vmatpush1.msra.mxu0 0.0
        %504 = vmatprep.subr.mxu0 0.0
        %505 = vmatpush1.msra.mxu0 0.0
        %506 = vmatprep.mubr.f32.mxu0 0.0
        %507 = vmatmul.mubr.f32.gmra.mrb[0].mxu0 %v436
        %v508 = vpop.f32.mrb[0].mxu0
        %v509 = vadd.f32 %v433, %v508
        %v510 = vpop.f32.mrb[0].mxu0
        %511 = vdwg.mxu0
        %v512 = vxor.u32 %v509, 2147483648
        %v513 = vmul.f32 %v512, 1.442695
        %v514 = vpow.pop %v513
        %v515 = vadd.f32 %v514, 1.0
        %v516 = vrcp.pop %v515
        %v517 = vmul.f32 1.0, %v516
        %v518 = vld [vmem:[%s5] sm:$0xff]
        %v519 = vld [vmem:[%s5 + $0x8] sm:$0xff]
        %v520 = vld [vmem:[%s5 + $0x10] sm:$0xff]
        %v521 = vld [vmem:[%s5 + $0x18] sm:$0xff]
        %523 = vset.pattern.permute.xlu0 0
        %524 = vperm.xlu0 %523, %v518
        %v525 = vpop.permute.xlu0 %524
        %528 = vset.pattern.permute.xlu0 0
        %529 = vperm.xlu0 %528, %v519
        %v530 = vpop.permute.xlu0 %529
        %533 = vset.pattern.permute.xlu0 0
        %534 = vperm.xlu0 %533, %v520
        %v535 = vpop.permute.xlu0 %534
        %538 = vset.pattern.permute.xlu0 0
        %539 = vperm.xlu0 %538, %v521
        %v540 = vpop.permute.xlu0 %539
        %v542 = vmul.f32 %v298, %v525
        %v543 = vmul.f32 %v299, %v525
        %v544 = vmul.f32 %v300, %v530
        %v545 = vmul.f32 %v301, %v530
        %v546 = vmul.f32 %v302, %v535
        %v547 = vmul.f32 %v303, %v535
        %v548 = vmul.f32 %v304, %v540
        %v549 = vmul.f32 %v305, %v540
        %v550 = vadd.f32 %v542, %v544
        %v551 = vadd.f32 %v550, %v546
        %v552 = vadd.f32 %v551, %v548
        %v553 = vrot.slane %v552, 4
        %v554 = vadd.f32 %v552, %v553
        %v555 = vrot.slane %v554, 2
        %v556 = vadd.f32 %v554, %v555
        %v557 = vrot.slane %v556, 1
        %v558 = vadd.f32 %v556, %v557
        %v559 = vadd.f32 %v543, %v545
        %v560 = vadd.f32 %v559, %v547
        %v561 = vadd.f32 %v560, %v549
        %v562 = vrot.slane %v561, 4
        %v563 = vadd.f32 %v561, %v562
        %v564 = vrot.slane %v563, 2
        %v565 = vadd.f32 %v563, %v564
        %v566 = vrot.slane %v565, 1
        %v567 = vadd.f32 %v565, %v566
        %s568 = sld [smem:[#allocation2]]
        %v569 = vstv %s568
        %v570 = vadd.f32 %v558, %v569
        %v571 = vadd.f32 %v567, %v569
        %v572 = vxor.u32 %v570, 2147483648
        %v573 = vxor.u32 %v571, 2147483648
        %v574 = vmul.f32 %v572, 1.442695
        %v575 = vpow.pop %v574
        %v576 = vmul.f32 %v573, 1.442695
        %v577 = vpow.pop %v576
        %v578 = vadd.f32 %v575, 1.0
        %v579 = vadd.f32 %v577, 1.0
        %v580 = vrcp.pop %v578
        %v581 = vmul.f32 1.0, %v580
        %v582 = vrcp.pop %v579
        %v583 = vmul.f32 1.0, %v582
        %v584 = vlaneseq
        %v585 = vshrl.u32 %v584, 7
        %v586 = vsub.s32 0, %v585
        %v587 = vrot.slane %v517, %v586
        %589 = vbcast.lane.b32.xlu0 %v587, 256
        %v590 = vpop.permute.xlu0 %589
        %s592 = sor.u32 256, 8
        %593 = vbcast.lane.b32.xlu0 %v587, %s592
        %v594 = vpop.permute.xlu0 %593
        %s596 = sor.u32 256, 16
        %597 = vbcast.lane.b32.xlu0 %v587, %s596
        %v598 = vpop.permute.xlu0 %597
        %s600 = sor.u32 256, 24
        %601 = vbcast.lane.b32.xlu0 %v587, %s600
        %v602 = vpop.permute.xlu0 %601
        %v603 = vadd.f32 %v590, %v581
        %v604 = vadd.f32 %v590, %v583
        %v605 = vadd.f32 %v594, %v581
        %v606 = vadd.f32 %v594, %v583
        %v607 = vadd.f32 %v598, %v581
        %v608 = vadd.f32 %v598, %v583
        %v609 = vadd.f32 %v602, %v581
        %v610 = vadd.f32 %v602, %v583
        %v611 = vmul.f32 %v298, %v603
        %v612 = vmul.f32 %v299, %v604
        %v613 = vmul.f32 %v300, %v605
        %v614 = vmul.f32 %v301, %v606
        %v615 = vmul.f32 %v302, %v607
        %v616 = vmul.f32 %v303, %v608
        %v617 = vmul.f32 %v304, %v609
        %v618 = vmul.f32 %v305, %v610
        %619 = vst [vmem:[%s297] sm:$0xff] %v611
        %620 = vst [vmem:[%s297 + $0x8] sm:$0xff] %v612
        %621 = vst [vmem:[%s297 + $0x10] sm:$0xff] %v613
        %622 = vst [vmem:[%s297 + $0x18] sm:$0xff] %v614
        %623 = vst [vmem:[%s297 + $0x20] sm:$0xff] %v615
        %624 = vst [vmem:[%s297 + $0x28] sm:$0xff] %v616
        %625 = vst [vmem:[%s297 + $0x30] sm:$0xff] %v617
        %626 = vst [vmem:[%s297 + $0x38] sm:$0xff] %v618
        %s627 = sand.u32 %s185, 1
        %s628 = scalar_lea.sflag [#allocation5], %s627
        %s629 = sand.u32 %s185, 1
        %s630 = smul.addr %s629, 64
        %s631 = scalar_lea.vmem [#allocation6], %s630
        // Predicated region
        $region53: #{tpu_custom_call.1} parent=47 // pred_check
          %p632 = pneg %p195
        $region54: #{tpu_custom_call.1} parent=47 // pred_check_branch
          %634 = sbr.rel (%p632) target = $region56
        $region55: #{tpu_custom_call.1} parent=47 // pred_region
          %s636 = ssub.s32 1024, 1024
          %637 = vsyncadd %s628, %s636
          %s638 = smul.addr %s25, 8
          %s639 = smul.addr %s638, 128
          %s640 = scalar_lea.hbm %s7, %s639
          %s641 = sshll.u32 %s631, 4
          %s642 = int_to_ptr.vmem [resolvable:$true] %s641
          %647 = dma.vmem_to_hbm [thread:$0]  %s642, 1024, %s640, %s628, 256, 256, 16
        $region56: #{tpu_custom_call.1} parent=47 // pred_fallthru
          _
      $region48: #{tpu_custom_call.1} parent=5 // pred_fallthru
        _
      %p648 = scmp.le.s32.totalorder 2, %s20
      // Predicated region
      $region57: #{tpu_custom_call.1} parent=5 // pred_check
        %p649 = pneg %p648
      $region58: #{tpu_custom_call.1} parent=5 // pred_check_branch
        %651 = sbr.rel (%p649) target = $region60
      $region59: #{tpu_custom_call.1} parent=5 // pred_region
        %s652 = ssub.s32 %s20, 2
        // Predicated region
        $region61: #{tpu_custom_call.1} parent=59 // pred_check
          %p653 = pneg %p201
        $region62: #{tpu_custom_call.1} parent=59 // pred_check_branch
          %655 = sbr.rel (%p653) target = $region64
        $region63: #{tpu_custom_call.1} parent=59 // pred_region
          %s656 = sand.u32 %s186, 1
          %s657 = scalar_lea.sflag [#allocation5], %s656
          %s658 = sand.u32 %s186, 1
          %s659 = smul.addr %s658, 64
          %s660 = scalar_lea.vmem [#allocation6], %s659
          %661 = dma.done %s657, 1024
        $region64: #{tpu_custom_call.1} parent=59 // pred_fallthru
          _
      $region60: #{tpu_custom_call.1} parent=5 // pred_fallthru
        _
    $region6: #{tpu_custom_call.1} parent=1 // loop_footer
      %s24 = sadd.s32 1, %s20
    $region7: #{tpu_custom_call.1} parent=1 // loop_footer_branch
      %19 = sbr.rel target = $region3
    $region8: #{tpu_custom_call.1} parent=1 // loop_exit
      _
    %662 = vsyncpa [#allocation4], 1
    %s663 = scalar_lea.sflag [#allocation4], 1
    %664 = vsyncpa %s663, 1
    %665 = vsyncpa [#allocation5], 1
    %s666 = scalar_lea.sflag [#allocation5], 1
    %667 = vsyncpa %s666, 1

</llo_original>
